<compile_context>
chip_gen: v5e
topology: v5e:2x2
jax: 0.10.0
libtpu: 0.0.40
codegen_flags: <defaults>
</compile_context>

<pallas_src>
import functools
from typing import NamedTuple

import jax
import jax.numpy as jnp
from jax.experimental import pallas as pl
from jax.experimental.pallas import tpu as pltpu


def _round_up(n, m):
    return ((n + m - 1) // m) * m


# ---------------------------------------------------------------------------
# Kernel
# ---------------------------------------------------------------------------
def _classifier_kernel(x_ref, w0_ref, wh_ref, wf_ref, bias_ref,
                       probs_ref, act_ref, *, n_layers, neg_slope, hp, lp):
    bias = bias_ref[...]                          # (n_layers+2, PMAX) f32, tiny

    # First dense layer + ReLU: [TB, DP] @ [DP, HP]  (bf16 MXU, f32 acc).
    h = jnp.dot(x_ref[...], w0_ref[...], preferred_element_type=jnp.float32)
    h = jnp.maximum(h + bias[0:1, :hp], 0.0)

    # Hidden layers (static unroll; n_layers is small).
    for i in range(n_layers):
        z = jnp.dot(h.astype(jnp.bfloat16), wh_ref[i],
                    preferred_element_type=jnp.float32) + bias[i + 1:i + 2, :hp]
        if neg_slope is not None:
            # leaky_relu(z) == max(z, a*z) for 0 <= a < 1.
            h = jnp.maximum(z, neg_slope * z)
        else:
            h = jnp.maximum(z, 0.0)

    # "activation" output = output of the before-last layer.
    act_ref[...] = h.astype(act_ref.dtype)

    # Final layer + softmax over label lanes.  Padded label lanes carry a
    # -1e30 bias (folded in by prepare_params), so exp underflows to 0 and no
    # explicit mask is needed; normalization over real lanes is unaffected.
    z = jnp.dot(h.astype(jnp.bfloat16), wf_ref[...],
                preferred_element_type=jnp.float32) + bias[n_layers + 1:, :lp]
    m = jnp.max(z, axis=1, keepdims=True)
    p = jnp.exp(z - m)
    probs_ref[...] = p * pl.reciprocal(jnp.sum(p, axis=1, keepdims=True),
                                       approx=True)


# ---------------------------------------------------------------------------
# Parameter preparation (hoisted out of the per-call path)
# ---------------------------------------------------------------------------
class PreparedParams(NamedTuple):
    w0: jax.Array      # (DP, HP)  bf16
    wh: jax.Array      # (n_layers, HP, HP) bf16
    wf: jax.Array      # (HP, LP)  bf16
    bias: jax.Array    # (n_layers+2, PMAX) f32; final row padded lanes = -1e30
    d_in: int
    h_dim: int
    label_dim: int
    n_layers: int


def prepare_params(params, *, n_layers, lane_align=None):
    """Pad + cast parameters once (not per forward call)."""
    assert n_layers >= 1
    w0, b0, wh, bh, wf, bf = params
    d_in, h_dim = w0.shape
    label_dim = wf.shape[1]

    if lane_align is None:
        # v6e/v7x MXU tiles are 2x256x256: 256-align large matmul dims; 128
        # keeps small configs compact and matches v5e's 4x128x128 MXU.
        lane_align = 256 if h_dim >= 512 else 128
    DP = _round_up(d_in, lane_align)
    HP = _round_up(h_dim, lane_align)
    LP = _round_up(label_dim, 128)          # label_dim is usually tiny
    PMAX = max(HP, LP)

    w0p = jnp.pad(w0.astype(jnp.bfloat16), ((0, DP - d_in), (0, HP - h_dim)))
    whp = jnp.pad(wh.astype(jnp.bfloat16),
                  ((0, 0), (0, HP - h_dim), (0, HP - h_dim)))
    wfp = jnp.pad(wf.astype(jnp.bfloat16),
                  ((0, HP - h_dim), (0, LP - label_dim)))

    # One merged bias array: row 0 = first layer, rows 1..n_layers = hidden,
    # row n_layers+1 = final layer with the padded-label mask folded in as a
    # large finite negative (avoids inf - inf = NaN in the max-subtract).
    bias = jnp.zeros((n_layers + 2, PMAX), jnp.float32)
    bias = bias.at[0, :h_dim].set(jnp.reshape(b0, (-1,)).astype(jnp.float32))
    bias = bias.at[1:1 + n_layers, :h_dim].set(
        jnp.reshape(bh, (n_layers, h_dim)).astype(jnp.float32))
    final_row = jnp.full((PMAX,), -1e30, jnp.float32).at[:label_dim].set(
        jnp.reshape(bf, (-1,)).astype(jnp.float32))
    bias = bias.at[n_layers + 1].set(final_row)

    return PreparedParams(w0p, whp, wfp, bias, d_in, h_dim, label_dim, n_layers)


# ---------------------------------------------------------------------------
# Forward
# ---------------------------------------------------------------------------
def _const_spec(shape, single_buffer):
    idx_map = lambda i: (0,) * len(shape)
    if single_buffer:
        # Constant index_map -> DMA only runs on step 0; one buffer suffices.
        return pl.BlockSpec(shape, idx_map, pipeline_mode=pl.Buffered(1))
    return pl.BlockSpec(shape, idx_map)


def linear_classifier_forward(x, prepared, *, neg_slope, batch_tile=256,
                              act_dtype=jnp.float32):
    """x: [batch, seq_len, input_dim] -> (softmax probs [B, label_dim],
    activation [B, h_dim]).  Set act_dtype=jnp.bfloat16 to halve the largest
    HBM writeback if downstream tolerates bf16 activations."""
    assert neg_slope is None or 0.0 <= float(neg_slope) < 1.0, (
        "leaky_relu identity max(z, a*z) requires 0 <= neg_slope < 1")

    n_layers = prepared.n_layers
    batch = x.shape[0]
    x2d = x.reshape((batch, -1)).astype(jnp.bfloat16)
    d_in = prepared.d_in
    assert x2d.shape[1] == d_in, "x feature dim does not match parameters"

    DP, HP = prepared.w0.shape
    LP = prepared.wf.shape[1]
    PMAX = prepared.bias.shape[1]

    # Batch tiling: ensure >= 2 grid steps when the batch allows, so the
    # "parallel" axis can be sharded across v7x's two TensorCores.
    B8 = _round_up(batch, 8)
    TB = min(batch_tile, B8)
    if B8 >= 16:
        TB = min(TB, max(8, (B8 // 2) // 8 * 8))
    TB = _round_up(TB, 8)
    B_pad = _round_up(B8, TB)

    # Pad x only when actually needed (skip the extra HBM round trip otherwise).
    if (B_pad, DP) != (batch, d_in):
        x2d = jnp.pad(x2d, ((0, B_pad - batch), (0, DP - d_in)))

    kernel = functools.partial(_classifier_kernel, n_layers=n_layers,
                               neg_slope=neg_slope, hp=HP, lp=LP)

    out_shapes = (
        jax.ShapeDtypeStruct((B_pad, LP), jnp.float32),   # softmax probs (padded)
        jax.ShapeDtypeStruct((B_pad, HP), act_dtype),     # activation    (padded)
    )

    def run(single_buffer_weights):
        # Explicit VMEM budget from the actual footprint (default scoped VMEM
        # is 16 MiB on v5e / 32 MiB on v6e,v7x and easily exceeded by a
        # resident weight stack + double-buffered tiles).
        act_bytes = jnp.dtype(act_dtype).itemsize
        w_buf = 1 if single_buffer_weights else 2
        weight_bytes = (DP * HP + n_layers * HP * HP + HP * LP) * 2   # bf16
        bias_bytes = _round_up(n_layers + 2, 8) * PMAX * 4
        x_bytes = TB * DP * 2
        out_bytes = TB * LP * 4 + TB * HP * act_bytes
        footprint = w_buf * (weight_bytes + bias_bytes) + 2 * (x_bytes + out_bytes)
        vmem_limit = int(min(max(2 * footprint + (4 << 20), 16 << 20), 96 << 20))

        in_specs = [
            pl.BlockSpec((TB, DP), lambda i: (i, 0)),                     # x tile
            _const_spec((DP, HP), single_buffer_weights),                 # w0
            _const_spec((n_layers, HP, HP), single_buffer_weights),       # wh
            _const_spec((HP, LP), single_buffer_weights),                 # wf
            _const_spec((n_layers + 2, PMAX), single_buffer_weights),     # biases
        ]
        out_specs = (
            pl.BlockSpec((TB, LP), lambda i: (i, 0)),
            pl.BlockSpec((TB, HP), lambda i: (i, 0)),
        )
        return pl.pallas_call(
            kernel,
            out_shape=out_shapes,
            grid_spec=pltpu.PrefetchScalarGridSpec(
                num_scalar_prefetch=0,
                grid=(B_pad // TB,),
                in_specs=in_specs,
                out_specs=out_specs,
            ),
            compiler_params=pltpu.CompilerParams(
                dimension_semantics=("parallel",),
                vmem_limit_bytes=vmem_limit),
        )(x2d, prepared.w0, prepared.wh, prepared.wf, prepared.bias)

    try:
        probs_p, act_p = run(True)
    except Exception:
        # Fallback if this jax version rejects pipeline_mode=pl.Buffered(1):
        # default double-buffered weights (correct, just more VMEM).
        probs_p, act_p = run(False)

    return probs_p[:batch, :prepared.label_dim], act_p[:batch, :prepared.h_dim]


# ---------------------------------------------------------------------------
# Test harness
# ---------------------------------------------------------------------------
def init_params(key, input_dim, h_dim, label_dim, seq_len, n_layers):
    """Deterministic synthetic parameters (shapes match nn.Linear, transposed)."""
    d_in = seq_len * input_dim
    keys = jax.random.split(key, 6)
    w0 = jax.random.normal(keys[0], (d_in, h_dim), jnp.float32) * 0.05
    b0 = jax.random.normal(keys[1], (1, h_dim), jnp.float32) * 0.05
    wh = jax.random.normal(keys[2], (n_layers, h_dim, h_dim), jnp.float32) * 0.05
    bh = jax.random.normal(keys[3], (n_layers, 1, h_dim), jnp.float32) * 0.05
    wf = jax.random.normal(keys[4], (h_dim, label_dim), jnp.float32) * 0.05
    bf = jax.random.normal(keys[5], (1, label_dim), jnp.float32) * 0.05
    return (w0, b0, wh, bh, wf, bf)


def _reference(x, params, *, neg_slope, n_layers):
    """Pure-JAX reference mirroring the PyTorch forward (same bf16 matmul path)."""
    w0, b0, wh, bh, wf, bf = params
    h = x.reshape((x.shape[0], -1))
    h = jnp.dot(h.astype(jnp.bfloat16), w0.astype(jnp.bfloat16),
                preferred_element_type=jnp.float32) + b0.reshape(1, -1)
    h = jnp.maximum(h, 0.0)
    for i in range(n_layers):
        z = jnp.dot(h.astype(jnp.bfloat16), wh[i].astype(jnp.bfloat16),
                    preferred_element_type=jnp.float32) + bh[i].reshape(1, -1)
        if neg_slope is not None:
            h = jnp.maximum(z, neg_slope * z)
        else:
            h = jnp.maximum(z, 0.0)
    act = h
    z = jnp.dot(h.astype(jnp.bfloat16), wf.astype(jnp.bfloat16),
                preferred_element_type=jnp.float32) + bf.reshape(1, -1)
    return jax.nn.softmax(z, axis=1), act


if __name__ == "__main__":
    # Small shapes consistent with the module's forward.
    batch, seq_len, input_dim = 2, 8, 16
    h_dim, label_dim = 32, 4
    neg_slope, n_layers = 0.1, 2

    key = jax.random.PRNGKey(0)
    kx, kp = jax.random.split(key)
    x = jax.random.normal(kx, (batch, seq_len, input_dim), jnp.float32)
    params = init_params(kp, input_dim, h_dim, label_dim, seq_len, n_layers)

    # Pad/cast parameters once (hoisted out of the per-call path).
    prepared = prepare_params(params, n_layers=n_layers)

    logits, activation = linear_classifier_forward(
        x, prepared, neg_slope=neg_slope)
    jax.block_until_ready((logits, activation))

    # Sanity check against a pure-JAX reference (bf16 matmul path; approx
    # reciprocal adds ~1e-3 relative error on the softmax normalization).
    ref_logits, ref_act = _reference(x, params, neg_slope=neg_slope,
                                     n_layers=n_layers)
    assert logits.shape == (batch, label_dim)
    assert activation.shape == (batch, h_dim)
    assert bool(jnp.all(jnp.isfinite(logits))) and bool(jnp.all(jnp.isfinite(activation)))
    assert jnp.allclose(activation, ref_act, atol=2e-3, rtol=2e-3), "activation mismatch"
    assert jnp.allclose(logits, ref_logits, atol=5e-3, rtol=5e-3), "logits mismatch"

    print("KERNEL_OK")
</pallas_src>

<mosaic_0001>
module attributes {stable_mosaic.version = 11 : i64} {
  func.func @_classifier_kernel(%arg0: i32, %arg1: memref<8x128xbf16, #tpu.memory_space<vmem>>, %arg2: memref<128x128xbf16, #tpu.memory_space<vmem>>, %arg3: memref<2x128x128xbf16, #tpu.memory_space<vmem>>, %arg4: memref<128x128xbf16, #tpu.memory_space<vmem>>, %arg5: memref<4x128xf32, #tpu.memory_space<vmem>>, %arg6: memref<8x128xf32, #tpu.memory_space<vmem>>, %arg7: memref<8x128xf32, #tpu.memory_space<vmem>>) attributes {dimension_semantics = [#tpu.dimension_semantics<parallel>], iteration_bounds = array<i64: 1>, scalar_prefetch = 0 : i64, scratch_operands = 0 : i64, tpu.core_type = #tpu.core_type<tc>, window_params = [{transform_indices = @transform_0, window_bounds = array<i64: 8, 128>}, {pipeline_mode = #tpu.pipeline_mode<synchronous>, transform_indices = @transform_1, window_bounds = array<i64: 128, 128>}, {pipeline_mode = #tpu.pipeline_mode<synchronous>, transform_indices = @transform_2, window_bounds = array<i64: 2, 128, 128>}, {pipeline_mode = #tpu.pipeline_mode<synchronous>, transform_indices = @transform_3, window_bounds = array<i64: 128, 128>}, {pipeline_mode = #tpu.pipeline_mode<synchronous>, transform_indices = @transform_4, window_bounds = array<i64: 4, 128>}, {transform_indices = @transform_5, window_bounds = array<i64: 8, 128>}, {transform_indices = @transform_6, window_bounds = array<i64: 8, 128>}]} {
    %c0 = arith.constant 0 : index
    %c0_0 = arith.constant 0 : index
    %0 = vector.load %arg5[%c0, %c0_0] : memref<4x128xf32, #tpu.memory_space<vmem>>, vector<4x128xf32>
    %c0_1 = arith.constant 0 : index
    %c0_2 = arith.constant 0 : index
    %1 = vector.load %arg1[%c0_1, %c0_2] : memref<8x128xbf16, #tpu.memory_space<vmem>>, vector<8x128xbf16>
    %c0_3 = arith.constant 0 : index
    %c0_4 = arith.constant 0 : index
    %2 = vector.load %arg2[%c0_3, %c0_4] : memref<128x128xbf16, #tpu.memory_space<vmem>>, vector<128x128xbf16>
    %cst = arith.constant dense<0.000000e+00> : vector<8x128xf32>
    %3 = tpu.matmul %1, %2, %cst {dimension_numbers = #tpu.dot_dimension_numbers<[1], [0], [0], [1], [0, 0, 1, 1], [], []>} : vector<8x128xbf16>, vector<128x128xbf16>, vector<8x128xf32> -> vector<8x128xf32>
    %4 = vector.extract_strided_slice %0 {offsets = [0, 0], sizes = [1, 128], strides = [1, 1]} : vector<4x128xf32> to vector<1x128xf32>
    %5 = vector.broadcast %4 : vector<1x128xf32> to vector<8x128xf32>
    %6 = arith.addf %3, %5 : vector<8x128xf32>
    %cst_5 = arith.constant 0.000000e+00 : f32
    %7 = vector.broadcast %cst_5 : f32 to vector<8x128xf32>
    %8 = arith.maximumf %6, %7 : vector<8x128xf32>
    %9 = arith.truncf %8 : vector<8x128xf32> to vector<8x128xbf16>
    %c0_6 = arith.constant 0 : index
    %c0_7 = arith.constant 0 : index
    %c0_8 = arith.constant 0 : index
    %10 = vector.load %arg3[%c0_6, %c0_7, %c0_8] : memref<2x128x128xbf16, #tpu.memory_space<vmem>>, vector<1x128x128xbf16>
    %11 = vector.shape_cast %10 : vector<1x128x128xbf16> to vector<128x128xbf16>
    %cst_9 = arith.constant dense<0.000000e+00> : vector<8x128xf32>
    %12 = tpu.matmul %9, %11, %cst_9 {dimension_numbers = #tpu.dot_dimension_numbers<[1], [0], [0], [1], [0, 0, 1, 1], [], []>} : vector<8x128xbf16>, vector<128x128xbf16>, vector<8x128xf32> -> vector<8x128xf32>
    %13 = vector.extract_strided_slice %0 {offsets = [1, 0], sizes = [1, 128], strides = [1, 1]} : vector<4x128xf32> to vector<1x128xf32>
    %14 = vector.broadcast %13 : vector<1x128xf32> to vector<8x128xf32>
    %15 = arith.addf %12, %14 : vector<8x128xf32>
    %cst_10 = arith.constant 1.000000e-01 : f32
    %16 = vector.broadcast %cst_10 : f32 to vector<8x128xf32>
    %17 = arith.mulf %16, %15 : vector<8x128xf32>
    %18 = arith.maximumf %15, %17 : vector<8x128xf32>
    %19 = arith.truncf %18 : vector<8x128xf32> to vector<8x128xbf16>
    %c1 = arith.constant 1 : index
    %c0_11 = arith.constant 0 : index
    %c0_12 = arith.constant 0 : index
    %20 = vector.load %arg3[%c1, %c0_11, %c0_12] : memref<2x128x128xbf16, #tpu.memory_space<vmem>>, vector<1x128x128xbf16>
    %21 = vector.shape_cast %20 : vector<1x128x128xbf16> to vector<128x128xbf16>
    %cst_13 = arith.constant dense<0.000000e+00> : vector<8x128xf32>
    %22 = tpu.matmul %19, %21, %cst_13 {dimension_numbers = #tpu.dot_dimension_numbers<[1], [0], [0], [1], [0, 0, 1, 1], [], []>} : vector<8x128xbf16>, vector<128x128xbf16>, vector<8x128xf32> -> vector<8x128xf32>
    %23 = vector.extract_strided_slice %0 {offsets = [2, 0], sizes = [1, 128], strides = [1, 1]} : vector<4x128xf32> to vector<1x128xf32>
    %24 = vector.broadcast %23 : vector<1x128xf32> to vector<8x128xf32>
    %25 = arith.addf %22, %24 : vector<8x128xf32>
    %cst_14 = arith.constant 1.000000e-01 : f32
    %26 = vector.broadcast %cst_14 : f32 to vector<8x128xf32>
    %27 = arith.mulf %26, %25 : vector<8x128xf32>
    %28 = arith.maximumf %25, %27 : vector<8x128xf32>
    %c0_15 = arith.constant 0 : index
    %c0_16 = arith.constant 0 : index
    %29 = vector.load %arg7[%c0_15, %c0_16] : memref<8x128xf32, #tpu.memory_space<vmem>>, vector<8x128xf32>
    tpu.vector_store %arg7[%c0_15, %c0_16], %28 {strides = array<i32>} : memref<8x128xf32, #tpu.memory_space<vmem>>, vector<8x128xf32>,
    %30 = arith.truncf %28 : vector<8x128xf32> to vector<8x128xbf16>
    %c0_17 = arith.constant 0 : index
    %c0_18 = arith.constant 0 : index
    %31 = vector.load %arg4[%c0_17, %c0_18] : memref<128x128xbf16, #tpu.memory_space<vmem>>, vector<128x128xbf16>
    %cst_19 = arith.constant dense<0.000000e+00> : vector<8x128xf32>
    %32 = tpu.matmul %30, %31, %cst_19 {dimension_numbers = #tpu.dot_dimension_numbers<[1], [0], [0], [1], [0, 0, 1, 1], [], []>} : vector<8x128xbf16>, vector<128x128xbf16>, vector<8x128xf32> -> vector<8x128xf32>
    %33 = vector.extract_strided_slice %0 {offsets = [3, 0], sizes = [1, 128], strides = [1, 1]} : vector<4x128xf32> to vector<1x128xf32>
    %34 = vector.broadcast %33 : vector<1x128xf32> to vector<8x128xf32>
    %35 = arith.addf %32, %34 : vector<8x128xf32>
    %cst_20 = arith.constant dense<0xFF800000> : vector<8xf32>
    %36 = vector.multi_reduction <maximumf>, %35, %cst_20 [1] : vector<8x128xf32> to vector<8xf32>
    %37 = vector.shape_cast %36 : vector<8xf32> to vector<8x1xf32>
    %38 = vector.broadcast %37 : vector<8x1xf32> to vector<8x128xf32>
    %39 = arith.subf %35, %38 : vector<8x128xf32>
    %40 = math.exp %39 : vector<8x128xf32>
    %cst_21 = arith.constant dense<0.000000e+00> : vector<8xf32>
    %41 = vector.multi_reduction <add>, %40, %cst_21 [1] : vector<8x128xf32> to vector<8xf32>
    %42 = vector.shape_cast %41 : vector<8xf32> to vector<8x1xf32>
    %43 = tpu.reciprocal %42 {approx = true} : vector<8x1xf32> -> vector<8x1xf32>
    %44 = vector.broadcast %43 : vector<8x1xf32> to vector<8x128xf32>
    %45 = arith.mulf %40, %44 : vector<8x128xf32>
    %c0_22 = arith.constant 0 : index
    %c0_23 = arith.constant 0 : index
    %46 = vector.load %arg6[%c0_22, %c0_23] : memref<8x128xf32, #tpu.memory_space<vmem>>, vector<8x128xf32>
    tpu.vector_store %arg6[%c0_22, %c0_23], %45 {strides = array<i32>} : memref<8x128xf32, #tpu.memory_space<vmem>>, vector<8x128xf32>,
    return
  }
  func.func @transform_0(%arg0: i32) -> (i32, i32) {
    %c0_i32 = arith.constant 0 : i32
    %c0_i32_0 = arith.constant 0 : i32
    return %arg0, %c0_i32 : i32, i32
  }
  func.func @transform_1(%arg0: i32) -> (i32, i32) {
    %c0_i32 = arith.constant 0 : i32
    %c0_i32_0 = arith.constant 0 : i32
    %c0_i32_1 = arith.constant 0 : i32
    return %c0_i32, %c0_i32_0 : i32, i32
  }
  func.func @transform_2(%arg0: i32) -> (i32, i32, i32) {
    %c0_i32 = arith.constant 0 : i32
    %c0_i32_0 = arith.constant 0 : i32
    %c0_i32_1 = arith.constant 0 : i32
    %c0_i32_2 = arith.constant 0 : i32
    return %c0_i32, %c0_i32_0, %c0_i32_1 : i32, i32, i32
  }
  func.func @transform_3(%arg0: i32) -> (i32, i32) {
    %c0_i32 = arith.constant 0 : i32
    %c0_i32_0 = arith.constant 0 : i32
    %c0_i32_1 = arith.constant 0 : i32
    return %c0_i32, %c0_i32_0 : i32, i32
  }
  func.func @transform_4(%arg0: i32) -> (i32, i32) {
    %c0_i32 = arith.constant 0 : i32
    %c0_i32_0 = arith.constant 0 : i32
    %c0_i32_1 = arith.constant 0 : i32
    return %c0_i32, %c0_i32_0 : i32, i32
  }
  func.func @transform_5(%arg0: i32) -> (i32, i32) {
    %c0_i32 = arith.constant 0 : i32
    %c0_i32_0 = arith.constant 0 : i32
    return %arg0, %c0_i32 : i32, i32
  }
  func.func @transform_6(%arg0: i32) -> (i32, i32) {
    %c0_i32 = arith.constant 0 : i32
    %c0_i32_0 = arith.constant 0 : i32
    return %arg0, %c0_i32 : i32, i32
  }
}

module attributes {stable_mosaic.version = 11 : i64} {
  func.func @_classifier_kernel(%arg0: i32, %arg1: memref<8x128xbf16, #tpu.memory_space<vmem>>, %arg2: memref<128x128xbf16, #tpu.memory_space<vmem>>, %arg3: memref<2x128x128xbf16, #tpu.memory_space<vmem>>, %arg4: memref<128x128xbf16, #tpu.memory_space<vmem>>, %arg5: memref<4x128xf32, #tpu.memory_space<vmem>>, %arg6: memref<8x128xf32, #tpu.memory_space<vmem>>, %arg7: memref<8x128xf32, #tpu.memory_space<vmem>>) attributes {dimension_semantics = [#tpu.dimension_semantics<parallel>], iteration_bounds = array<i64: 1>, scalar_prefetch = 0 : i64, scratch_operands = 0 : i64, tpu.core_type = #tpu.core_type<tc>, window_params = [{transform_indices = @transform_0, window_bounds = array<i64: 8, 128>}, {pipeline_mode = #tpu.pipeline_mode<synchronous>, transform_indices = @transform_1, window_bounds = array<i64: 128, 128>}, {pipeline_mode = #tpu.pipeline_mode<synchronous>, transform_indices = @transform_2, window_bounds = array<i64: 2, 128, 128>}, {pipeline_mode = #tpu.pipeline_mode<synchronous>, transform_indices = @transform_3, window_bounds = array<i64: 128, 128>}, {pipeline_mode = #tpu.pipeline_mode<synchronous>, transform_indices = @transform_4, window_bounds = array<i64: 4, 128>}, {transform_indices = @transform_5, window_bounds = array<i64: 8, 128>}, {transform_indices = @transform_6, window_bounds = array<i64: 8, 128>}]} {
    %c0 = arith.constant 0 : index
    %c0_0 = arith.constant 0 : index
    %0 = vector.load %arg5[%c0, %c0_0] : memref<4x128xf32, #tpu.memory_space<vmem>>, vector<4x128xf32>
    %c0_1 = arith.constant 0 : index
    %c0_2 = arith.constant 0 : index
    %1 = vector.load %arg1[%c0_1, %c0_2] : memref<8x128xbf16, #tpu.memory_space<vmem>>, vector<8x128xbf16>
    %c0_3 = arith.constant 0 : index
    %c0_4 = arith.constant 0 : index
    %2 = vector.load %arg2[%c0_3, %c0_4] : memref<128x128xbf16, #tpu.memory_space<vmem>>, vector<128x128xbf16>
    %cst = arith.constant dense<0.000000e+00> : vector<8x128xf32>
    %3 = tpu.matmul %1, %2, %cst {dimension_numbers = #tpu.dot_dimension_numbers<[1], [0], [0], [1], [0, 0, 1, 1], [], []>} : vector<8x128xbf16>, vector<128x128xbf16>, vector<8x128xf32> -> vector<8x128xf32>
    %4 = vector.extract_strided_slice %0 {offsets = [0, 0], sizes = [1, 128], strides = [1, 1]} : vector<4x128xf32> to vector<1x128xf32>
    %5 = vector.broadcast %4 : vector<1x128xf32> to vector<8x128xf32>
    %6 = arith.addf %3, %5 : vector<8x128xf32>
    %cst_5 = arith.constant 0.000000e+00 : f32
    %7 = vector.broadcast %cst_5 : f32 to vector<8x128xf32>
    %8 = arith.maximumf %6, %7 : vector<8x128xf32>
    %9 = arith.truncf %8 : vector<8x128xf32> to vector<8x128xbf16>
    %c0_6 = arith.constant 0 : index
    %c0_7 = arith.constant 0 : index
    %c0_8 = arith.constant 0 : index
    %10 = vector.load %arg3[%c0_6, %c0_7, %c0_8] : memref<2x128x128xbf16, #tpu.memory_space<vmem>>, vector<1x128x128xbf16>
    %11 = vector.shape_cast %10 : vector<1x128x128xbf16> to vector<128x128xbf16>
    %cst_9 = arith.constant dense<0.000000e+00> : vector<8x128xf32>
    %12 = tpu.matmul %9, %11, %cst_9 {dimension_numbers = #tpu.dot_dimension_numbers<[1], [0], [0], [1], [0, 0, 1, 1], [], []>} : vector<8x128xbf16>, vector<128x128xbf16>, vector<8x128xf32> -> vector<8x128xf32>
    %13 = vector.extract_strided_slice %0 {offsets = [1, 0], sizes = [1, 128], strides = [1, 1]} : vector<4x128xf32> to vector<1x128xf32>
    %14 = vector.broadcast %13 : vector<1x128xf32> to vector<8x128xf32>
    %15 = arith.addf %12, %14 : vector<8x128xf32>
    %cst_10 = arith.constant 1.000000e-01 : f32
    %16 = vector.broadcast %cst_10 : f32 to vector<8x128xf32>
    %17 = arith.mulf %16, %15 : vector<8x128xf32>
    %18 = arith.maximumf %15, %17 : vector<8x128xf32>
    %19 = arith.truncf %18 : vector<8x128xf32> to vector<8x128xbf16>
    %c1 = arith.constant 1 : index
    %c0_11 = arith.constant 0 : index
    %c0_12 = arith.constant 0 : index
    %20 = vector.load %arg3[%c1, %c0_11, %c0_12] : memref<2x128x128xbf16, #tpu.memory_space<vmem>>, vector<1x128x128xbf16>
    %21 = vector.shape_cast %20 : vector<1x128x128xbf16> to vector<128x128xbf16>
    %cst_13 = arith.constant dense<0.000000e+00> : vector<8x128xf32>
    %22 = tpu.matmul %19, %21, %cst_13 {dimension_numbers = #tpu.dot_dimension_numbers<[1], [0], [0], [1], [0, 0, 1, 1], [], []>} : vector<8x128xbf16>, vector<128x128xbf16>, vector<8x128xf32> -> vector<8x128xf32>
    %23 = vector.extract_strided_slice %0 {offsets = [2, 0], sizes = [1, 128], strides = [1, 1]} : vector<4x128xf32> to vector<1x128xf32>
    %24 = vector.broadcast %23 : vector<1x128xf32> to vector<8x128xf32>
    %25 = arith.addf %22, %24 : vector<8x128xf32>
    %cst_14 = arith.constant 1.000000e-01 : f32
    %26 = vector.broadcast %cst_14 : f32 to vector<8x128xf32>
    %27 = arith.mulf %26, %25 : vector<8x128xf32>
    %28 = arith.maximumf %25, %27 : vector<8x128xf32>
    %c0_15 = arith.constant 0 : index
    %c0_16 = arith.constant 0 : index
    %29 = vector.load %arg7[%c0_15, %c0_16] : memref<8x128xf32, #tpu.memory_space<vmem>>, vector<8x128xf32>
    tpu.vector_store %arg7[%c0_15, %c0_16], %28 {strides = array<i32>} : memref<8x128xf32, #tpu.memory_space<vmem>>, vector<8x128xf32>,
    %30 = arith.truncf %28 : vector<8x128xf32> to vector<8x128xbf16>
    %c0_17 = arith.constant 0 : index
    %c0_18 = arith.constant 0 : index
    %31 = vector.load %arg4[%c0_17, %c0_18] : memref<128x128xbf16, #tpu.memory_space<vmem>>, vector<128x128xbf16>
    %cst_19 = arith.constant dense<0.000000e+00> : vector<8x128xf32>
    %32 = tpu.matmul %30, %31, %cst_19 {dimension_numbers = #tpu.dot_dimension_numbers<[1], [0], [0], [1], [0, 0, 1, 1], [], []>} : vector<8x128xbf16>, vector<128x128xbf16>, vector<8x128xf32> -> vector<8x128xf32>
    %33 = vector.extract_strided_slice %0 {offsets = [3, 0], sizes = [1, 128], strides = [1, 1]} : vector<4x128xf32> to vector<1x128xf32>
    %34 = vector.broadcast %33 : vector<1x128xf32> to vector<8x128xf32>
    %35 = arith.addf %32, %34 : vector<8x128xf32>
    %cst_20 = arith.constant dense<0xFF800000> : vector<8xf32>
    %36 = vector.multi_reduction <maximumf>, %35, %cst_20 [1] : vector<8x128xf32> to vector<8xf32>
    %37 = vector.shape_cast %36 : vector<8xf32> to vector<8x1xf32>
    %38 = vector.broadcast %37 : vector<8x1xf32> to vector<8x128xf32>
    %39 = arith.subf %35, %38 : vector<8x128xf32>
    %40 = math.exp %39 : vector<8x128xf32>
    %cst_21 = arith.constant dense<0.000000e+00> : vector<8xf32>
    %41 = vector.multi_reduction <add>, %40, %cst_21 [1] : vector<8x128xf32> to vector<8xf32>
    %42 = vector.shape_cast %41 : vector<8xf32> to vector<8x1xf32>
    %43 = tpu.reciprocal %42 {approx = true} : vector<8x1xf32> -> vector<8x1xf32>
    %44 = vector.broadcast %43 : vector<8x1xf32> to vector<8x128xf32>
    %45 = arith.mulf %40, %44 : vector<8x128xf32>
    %c0_22 = arith.constant 0 : index
    %c0_23 = arith.constant 0 : index
    %46 = vector.load %arg6[%c0_22, %c0_23] : memref<8x128xf32, #tpu.memory_space<vmem>>, vector<8x128xf32>
    tpu.vector_store %arg6[%c0_22, %c0_23], %45 {strides = array<i32>} : memref<8x128xf32, #tpu.memory_space<vmem>>, vector<8x128xf32>,
    return
  }
  func.func @transform_0(%arg0: i32) -> (i32, i32) {
    %c0_i32 = arith.constant 0 : i32
    %c0_i32_0 = arith.constant 0 : i32
    return %arg0, %c0_i32 : i32, i32
  }
  func.func @transform_1(%arg0: i32) -> (i32, i32) {
    %c0_i32 = arith.constant 0 : i32
    %c0_i32_0 = arith.constant 0 : i32
    %c0_i32_1 = arith.constant 0 : i32
    return %c0_i32, %c0_i32_0 : i32, i32
  }
  func.func @transform_2(%arg0: i32) -> (i32, i32, i32) {
    %c0_i32 = arith.constant 0 : i32
    %c0_i32_0 = arith.constant 0 : i32
    %c0_i32_1 = arith.constant 0 : i32
    %c0_i32_2 = arith.constant 0 : i32
    return %c0_i32, %c0_i32_0, %c0_i32_1 : i32, i32, i32
  }
  func.func @transform_3(%arg0: i32) -> (i32, i32) {
    %c0_i32 = arith.constant 0 : i32
    %c0_i32_0 = arith.constant 0 : i32
    %c0_i32_1 = arith.constant 0 : i32
    return %c0_i32, %c0_i32_0 : i32, i32
  }
  func.func @transform_4(%arg0: i32) -> (i32, i32) {
    %c0_i32 = arith.constant 0 : i32
    %c0_i32_0 = arith.constant 0 : i32
    %c0_i32_1 = arith.constant 0 : i32
    return %c0_i32, %c0_i32_0 : i32, i32
  }
  func.func @transform_5(%arg0: i32) -> (i32, i32) {
    %c0_i32 = arith.constant 0 : i32
    %c0_i32_0 = arith.constant 0 : i32
    return %arg0, %c0_i32 : i32, i32
  }
  func.func @transform_6(%arg0: i32) -> (i32, i32) {
    %c0_i32 = arith.constant 0 : i32
    %c0_i32_0 = arith.constant 0 : i32
    return %arg0, %c0_i32 : i32, i32
  }
}

</mosaic_0001>

<llo_original>
// kernel: tpu_custom_call.1
$region0: #{tpu_custom_call.1}
  #allocation0 [shape = 'u32[]', space=smem, size = 0x4, offset = 0x4, fixed_abs, tag = 'smem constant byte address 0x4 - core index']
  #allocation1 [shape = 'u32[72,128]{1,0:T(1,128)}', space=vmem, size = 0x9000, scoped, tag = 'internal scratch']
  %s0 = inlined_call_operand.hbm [shape: bf16[8,128], index: 0, kind: input, shape index: {}]
  %s1 = inlined_call_operand.hbm [shape: bf16[128,128], index: 1, kind: input, shape index: {}]
  %s2 = inlined_call_operand.hbm [shape: bf16[2,128,128], index: 2, kind: input, shape index: {}]
  %s3 = inlined_call_operand.hbm [shape: bf16[128,128], index: 3, kind: input, shape index: {}]
  %s4 = inlined_call_operand.hbm [shape: f32[4,128], index: 4, kind: input, shape index: {}]
  %s5 = inlined_call_operand.hbm [shape: f32[8,128], index: 5, kind: output, shape index: {0}]
  %s6 = inlined_call_operand.hbm [shape: f32[8,128], index: 6, kind: output, shape index: {1}]
  %7 = xla_tuple %s5, %s6
  %s8 = sld [smem:[#allocation0]]
  $region58: #{tpu_custom_call.1} parent=0
    _
  %s10 = ssub.s32 1, %s8
  %s11 = scalar_select 0, %s10, %s8
  $region1: #{tpu_custom_call.1} parent=0
    #allocation2 [shape = 'u8[2048]{0}', space=vmem, size = 0x800, scoped, tag = 'input window, operand 0, single buffered']
    #allocation3 [shape = 's32[1]{0}', space=sflag, size = 0x4, scoped, tag = 'scoped memory for tpu_custom_call.1']
    #allocation4 [shape = 's32[1]{0}', space=sflag, size = 0x4, scoped, tag = 'scoped memory for tpu_custom_call.1']
    #allocation5 [shape = 'u8[32768]{0}', space=vmem, size = 0x8000, scoped, tag = 'input window, operand 1, single buffered']
    #allocation6 [shape = 's32[1]{0}', space=sflag, size = 0x4, scoped, tag = 'scoped memory for tpu_custom_call.1']
    #allocation7 [shape = 'u8[65536]{0}', space=vmem, size = 0x10000, scoped, tag = 'input window, operand 2, single buffered']
    #allocation8 [shape = 'u8[32768]{0}', space=vmem, size = 0x8000, scoped, tag = 'input window, operand 3, single buffered']
    #allocation9 [shape = 's32[1]{0}', space=sflag, size = 0x4, scoped, tag = 'scoped memory for tpu_custom_call.1']
    #allocation10 [shape = 'u8[2048]{0}', space=vmem, size = 0x800, scoped, tag = 'input window, operand 4, single buffered']
    #allocation11 [shape = 'u8[4096]{0}', space=vmem, size = 0x1000, scoped, tag = 'output window, operand 0, single buffered']
    #allocation12 [shape = 'u8[4096]{0}', space=vmem, size = 0x1000, scoped, tag = 'output window, operand 1, single buffered']
    #allocation13 [shape = 's32[1]{0}', space=sflag, size = 0x4, scoped, tag = 'scoped memory for tpu_custom_call.1']
    %12 = vsyncpa [#allocation3], 0
    %13 = vsyncpa [#allocation6], 0
    %14 = vsyncpa [#allocation9], 0
    %15 = vsyncpa [#allocation4], 0
    %16 = vsyncpa [#allocation13], 0
    // Predicated region
    $region2: #{tpu_custom_call.1} parent=1 // pred_check
      _
    $region3: #{tpu_custom_call.1} parent=1 // pred_check_branch
      %18 = sbr.rel (0) target = $region5
    $region4: #{tpu_custom_call.1} parent=1 // pred_region
      %20 = vsyncadd [#allocation3], 0
      %s22 = sshll.u32 %s0, 4
      %s23 = int_to_ptr.hbm [resolvable:$true] %s22
      %s24 = sshll.u32 [#allocation2], 4
      %s25 = int_to_ptr.vmem [resolvable:$true] %s24
      %27 = dma.hbm_to_vmem [thread:$0]  %s23, 64, %s25, [#allocation3]
    $region5: #{tpu_custom_call.1} parent=1 // pred_fallthru
      _
    // Predicated region
    $region6: #{tpu_custom_call.1} parent=1 // pred_check
      _
    $region7: #{tpu_custom_call.1} parent=1 // pred_check_branch
      %29 = sbr.rel (0) target = $region9
    $region8: #{tpu_custom_call.1} parent=1 // pred_region
      %31 = vsyncadd [#allocation6], 0
      %s32 = sshll.u32 %s1, 4
      %s33 = int_to_ptr.hbm [resolvable:$true] %s32
      %s34 = sshll.u32 [#allocation5], 4
      %s35 = int_to_ptr.vmem [resolvable:$true] %s34
      %40 = dma.hbm_to_vmem [thread:$0]  %s33, 1024, %s35, [#allocation6], 64, 64, 4
    $region9: #{tpu_custom_call.1} parent=1 // pred_fallthru
      _
    // Predicated region
    $region10: #{tpu_custom_call.1} parent=1 // pred_check
      _
    $region11: #{tpu_custom_call.1} parent=1 // pred_check_branch
      %42 = sbr.rel (0) target = $region13
    $region12: #{tpu_custom_call.1} parent=1 // pred_region
      %44 = vsyncadd [#allocation6], 0
      %s45 = sshll.u32 %s2, 4
      %s46 = int_to_ptr.hbm [resolvable:$true] %s45
      %s47 = sshll.u32 [#allocation7], 4
      %s48 = int_to_ptr.vmem [resolvable:$true] %s47
      %53 = dma.hbm_to_vmem [thread:$0]  %s46, 2048, %s48, [#allocation6], 64, 64, 4
    $region13: #{tpu_custom_call.1} parent=1 // pred_fallthru
      _
    // Predicated region
    $region14: #{tpu_custom_call.1} parent=1 // pred_check
      _
    $region15: #{tpu_custom_call.1} parent=1 // pred_check_branch
      %55 = sbr.rel (0) target = $region17
    $region16: #{tpu_custom_call.1} parent=1 // pred_region
      %57 = vsyncadd [#allocation9], 0
      %s58 = sshll.u32 %s3, 4
      %s59 = int_to_ptr.hbm [resolvable:$true] %s58
      %s60 = sshll.u32 [#allocation8], 4
      %s61 = int_to_ptr.vmem [resolvable:$true] %s60
      %66 = dma.hbm_to_vmem [thread:$0]  %s59, 1024, %s61, [#allocation9], 64, 64, 4
    $region17: #{tpu_custom_call.1} parent=1 // pred_fallthru
      _
    // Predicated region
    $region18: #{tpu_custom_call.1} parent=1 // pred_check
      _
    $region19: #{tpu_custom_call.1} parent=1 // pred_check_branch
      %68 = sbr.rel (0) target = $region21
    $region20: #{tpu_custom_call.1} parent=1 // pred_region
      %70 = vsyncadd [#allocation9], 0
      %s72 = sshll.u32 %s4, 4
      %s73 = int_to_ptr.hbm [resolvable:$true] %s72
      %s74 = sshll.u32 [#allocation10], 4
      %s75 = int_to_ptr.vmem [resolvable:$true] %s74
      %77 = dma.hbm_to_vmem [thread:$0]  %s73, 64, %s75, [#allocation9]
    $region21: #{tpu_custom_call.1} parent=1 // pred_fallthru
      _
    // Predicated region
    $region22: #{tpu_custom_call.1} parent=1 // pred_check
      _
    $region23: #{tpu_custom_call.1} parent=1 // pred_check_branch
      %79 = sbr.rel (0) target = $region25
    $region24: #{tpu_custom_call.1} parent=1 // pred_region
      %81 = dma.done [#allocation3], 64
    $region25: #{tpu_custom_call.1} parent=1 // pred_fallthru
      _
    // Predicated region
    $region26: #{tpu_custom_call.1} parent=1 // pred_check
      _
    $region27: #{tpu_custom_call.1} parent=1 // pred_check_branch
      %83 = sbr.rel (0) target = $region29
    $region28: #{tpu_custom_call.1} parent=1 // pred_region
      %85 = dma.done [#allocation6], 1024
    $region29: #{tpu_custom_call.1} parent=1 // pred_fallthru
      _
    // Predicated region
    $region30: #{tpu_custom_call.1} parent=1 // pred_check
      _
    $region31: #{tpu_custom_call.1} parent=1 // pred_check_branch
      %87 = sbr.rel (0) target = $region33
    $region32: #{tpu_custom_call.1} parent=1 // pred_region
      %89 = dma.done [#allocation6], 2048
    $region33: #{tpu_custom_call.1} parent=1 // pred_fallthru
      _
    // Predicated region
    $region34: #{tpu_custom_call.1} parent=1 // pred_check
      _
    $region35: #{tpu_custom_call.1} parent=1 // pred_check_branch
      %91 = sbr.rel (0) target = $region37
    $region36: #{tpu_custom_call.1} parent=1 // pred_region
      %93 = dma.done [#allocation9], 1024
    $region37: #{tpu_custom_call.1} parent=1 // pred_fallthru
      _
    // Predicated region
    $region38: #{tpu_custom_call.1} parent=1 // pred_check
      _
    $region39: #{tpu_custom_call.1} parent=1 // pred_check_branch
      %95 = sbr.rel (0) target = $region41
    $region40: #{tpu_custom_call.1} parent=1 // pred_region
      %97 = dma.done [#allocation9], 64
    $region41: #{tpu_custom_call.1} parent=1 // pred_fallthru
      _
    %v98 = vld [vmem:[#allocation10] sm:$0xf]
    %v99 = vld [vmem:[#allocation2] sm:$0xf]
    %v100 = vld [vmem:[#allocation5] sm:$0xf]
    %v101 = vld [vmem:[#allocation5 + $0x4] sm:$0xf]
    %v102 = vld [vmem:[#allocation5 + $0x8] sm:$0xf]
    %v103 = vld [vmem:[#allocation5 + $0xc] sm:$0xf]
    %v104 = vld [vmem:[#allocation5 + $0x10] sm:$0xf]
    %v105 = vld [vmem:[#allocation5 + $0x14] sm:$0xf]
    %v106 = vld [vmem:[#allocation5 + $0x18] sm:$0xf]
    %v107 = vld [vmem:[#allocation5 + $0x1c] sm:$0xf]
    %v108 = vld [vmem:[#allocation5 + $0x20] sm:$0xf]
    %v109 = vld [vmem:[#allocation5 + $0x24] sm:$0xf]
    %v110 = vld [vmem:[#allocation5 + $0x28] sm:$0xf]
    %v111 = vld [vmem:[#allocation5 + $0x2c] sm:$0xf]
    %v112 = vld [vmem:[#allocation5 + $0x30] sm:$0xf]
    %v113 = vld [vmem:[#allocation5 + $0x34] sm:$0xf]
    %v114 = vld [vmem:[#allocation5 + $0x38] sm:$0xf]
    %v115 = vld [vmem:[#allocation5 + $0x3c] sm:$0xf]
    %v116 = vperm.slane %v98, 0
    %v133 = vunpack.c.l.b16 %v100
    %v134 = vunpack.c.l.b16 %v101
    %v135 = vunpack.c.l.b16 %v102
    %v136 = vunpack.c.l.b16 %v103
    %v137 = vunpack.c.l.b16 %v104
    %v138 = vunpack.c.l.b16 %v105
    %v139 = vunpack.c.l.b16 %v106
    %v140 = vunpack.c.l.b16 %v107
    %v141 = vunpack.c.l.b16 %v108
    %v142 = vunpack.c.l.b16 %v109
    %v143 = vunpack.c.l.b16 %v110
    %v144 = vunpack.c.l.b16 %v111
    %v145 = vunpack.c.l.b16 %v112
    %v146 = vunpack.c.l.b16 %v113
    %v147 = vunpack.c.l.b16 %v114
    %v148 = vunpack.c.l.b16 %v115
    %v149 = vpack.c.b16 %v134, %v133
    %v150 = vpack.c.b16 %v136, %v135
    %v151 = vpack.c.b16 %v138, %v137
    %v152 = vpack.c.b16 %v140, %v139
    %v153 = vpack.c.b16 %v142, %v141
    %v154 = vpack.c.b16 %v144, %v143
    %v155 = vpack.c.b16 %v146, %v145
    %v156 = vpack.c.b16 %v148, %v147
    %165 = vmatpush.bf16.msra.mxu0 %v156
    %166 = vmatpush.bf16.msra.mxu0 %v155
    %167 = vmatpush.bf16.msra.mxu0 %v154
    %168 = vmatpush.bf16.msra.mxu0 %v153
    %169 = vmatpush.bf16.msra.mxu0 %v152
    %170 = vmatpush.bf16.msra.mxu0 %v151
    %171 = vmatpush.bf16.msra.mxu0 %v150
    %172 = vmatpush.bf16.msra.mxu0 %v149
    %173 = vmatmul.bf16.gmra.mxu0 %v99
    %v174 = vpop.f32.mrf.mxu0
    %v175 = vadd.f32 %v116, %v174
    %v176 = vpop.f32.mrf.mxu0
    %177 = vdwg.mxu0
    %v178 = vmax.f32 %v175, 0.0
    %v179 = vpack.c.bf16 %v178, %v178
    %v180 = vld [vmem:[#allocation7] sm:$0xf]
    %v181 = vld [vmem:[#allocation7 + $0x4] sm:$0xf]
    %v182 = vld [vmem:[#allocation7 + $0x8] sm:$0xf]
    %v183 = vld [vmem:[#allocation7 + $0xc] sm:$0xf]
    %v184 = vld [vmem:[#allocation7 + $0x10] sm:$0xf]
    %v185 = vld [vmem:[#allocation7 + $0x14] sm:$0xf]
    %v186 = vld [vmem:[#allocation7 + $0x18] sm:$0xf]
    %v187 = vld [vmem:[#allocation7 + $0x1c] sm:$0xf]
    %v188 = vld [vmem:[#allocation7 + $0x20] sm:$0xf]
    %v189 = vld [vmem:[#allocation7 + $0x24] sm:$0xf]
    %v190 = vld [vmem:[#allocation7 + $0x28] sm:$0xf]
    %v191 = vld [vmem:[#allocation7 + $0x2c] sm:$0xf]
    %v192 = vld [vmem:[#allocation7 + $0x30] sm:$0xf]
    %v193 = vld [vmem:[#allocation7 + $0x34] sm:$0xf]
    %v194 = vld [vmem:[#allocation7 + $0x38] sm:$0xf]
    %v195 = vld [vmem:[#allocation7 + $0x3c] sm:$0xf]
    %v196 = vperm.slane %v98, 1
    %v213 = vunpack.c.l.b16 %v180
    %v214 = vunpack.c.l.b16 %v181
    %v215 = vunpack.c.l.b16 %v182
    %v216 = vunpack.c.l.b16 %v183
    %v217 = vunpack.c.l.b16 %v184
    %v218 = vunpack.c.l.b16 %v185
    %v219 = vunpack.c.l.b16 %v186
    %v220 = vunpack.c.l.b16 %v187
    %v221 = vunpack.c.l.b16 %v188
    %v222 = vunpack.c.l.b16 %v189
    %v223 = vunpack.c.l.b16 %v190
    %v224 = vunpack.c.l.b16 %v191
    %v225 = vunpack.c.l.b16 %v192
    %v226 = vunpack.c.l.b16 %v193
    %v227 = vunpack.c.l.b16 %v194
    %v228 = vunpack.c.l.b16 %v195
    %v229 = vpack.c.b16 %v214, %v213
    %v230 = vpack.c.b16 %v216, %v215
    %v231 = vpack.c.b16 %v218, %v217
    %v232 = vpack.c.b16 %v220, %v219
    %v233 = vpack.c.b16 %v222, %v221
    %v234 = vpack.c.b16 %v224, %v223
    %v235 = vpack.c.b16 %v226, %v225
    %v236 = vpack.c.b16 %v228, %v227
    %245 = vmatpush.bf16.msra.mxu0 %v236
    %246 = vmatpush.bf16.msra.mxu0 %v235
    %247 = vmatpush.bf16.msra.mxu0 %v234
    %248 = vmatpush.bf16.msra.mxu0 %v233
    %249 = vmatpush.bf16.msra.mxu0 %v232
    %250 = vmatpush.bf16.msra.mxu0 %v231
    %251 = vmatpush.bf16.msra.mxu0 %v230
    %252 = vmatpush.bf16.msra.mxu0 %v229
    %253 = vmatmul.bf16.gmra.mxu0 %v179
    %v254 = vpop.f32.mrf.mxu0
    %v255 = vadd.f32 %v196, %v254
    %v256 = vpop.f32.mrf.mxu0
    %257 = vdwg.mxu0
    %v258 = vmul.f32 %v255, 0.1
    %v259 = vmax.f32 %v255, %v258
    %v260 = vpack.c.bf16 %v259, %v259
    %s261 = scalar_lea.vmem [#allocation7], 64
    %v262 = vld [vmem:[%s261] sm:$0xf]
    %v263 = vld [vmem:[%s261 + $0x4] sm:$0xf]
    %v264 = vld [vmem:[%s261 + $0x8] sm:$0xf]
    %v265 = vld [vmem:[%s261 + $0xc] sm:$0xf]
    %v266 = vld [vmem:[%s261 + $0x10] sm:$0xf]
    %v267 = vld [vmem:[%s261 + $0x14] sm:$0xf]
    %v268 = vld [vmem:[%s261 + $0x18] sm:$0xf]
    %v269 = vld [vmem:[%s261 + $0x1c] sm:$0xf]
    %v270 = vld [vmem:[%s261 + $0x20] sm:$0xf]
    %v271 = vld [vmem:[%s261 + $0x24] sm:$0xf]
    %v272 = vld [vmem:[%s261 + $0x28] sm:$0xf]
    %v273 = vld [vmem:[%s261 + $0x2c] sm:$0xf]
    %v274 = vld [vmem:[%s261 + $0x30] sm:$0xf]
    %v275 = vld [vmem:[%s261 + $0x34] sm:$0xf]
    %v276 = vld [vmem:[%s261 + $0x38] sm:$0xf]
    %v277 = vld [vmem:[%s261 + $0x3c] sm:$0xf]
    %v278 = vperm.slane %v98, 2
    %v295 = vunpack.c.l.b16 %v262
    %v296 = vunpack.c.l.b16 %v263
    %v297 = vunpack.c.l.b16 %v264
    %v298 = vunpack.c.l.b16 %v265
    %v299 = vunpack.c.l.b16 %v266
    %v300 = vunpack.c.l.b16 %v267
    %v301 = vunpack.c.l.b16 %v268
    %v302 = vunpack.c.l.b16 %v269
    %v303 = vunpack.c.l.b16 %v270
    %v304 = vunpack.c.l.b16 %v271
    %v305 = vunpack.c.l.b16 %v272
    %v306 = vunpack.c.l.b16 %v273
    %v307 = vunpack.c.l.b16 %v274
    %v308 = vunpack.c.l.b16 %v275
    %v309 = vunpack.c.l.b16 %v276
    %v310 = vunpack.c.l.b16 %v277
    %v311 = vpack.c.b16 %v296, %v295
    %v312 = vpack.c.b16 %v298, %v297
    %v313 = vpack.c.b16 %v300, %v299
    %v314 = vpack.c.b16 %v302, %v301
    %v315 = vpack.c.b16 %v304, %v303
    %v316 = vpack.c.b16 %v306, %v305
    %v317 = vpack.c.b16 %v308, %v307
    %v318 = vpack.c.b16 %v310, %v309
    %327 = vmatpush.bf16.msra.mxu0 %v318
    %328 = vmatpush.bf16.msra.mxu0 %v317
    %329 = vmatpush.bf16.msra.mxu0 %v316
    %330 = vmatpush.bf16.msra.mxu0 %v315
    %331 = vmatpush.bf16.msra.mxu0 %v314
    %332 = vmatpush.bf16.msra.mxu0 %v313
    %333 = vmatpush.bf16.msra.mxu0 %v312
    %334 = vmatpush.bf16.msra.mxu0 %v311
    %335 = vmatmul.bf16.gmra.mxu0 %v260
    %v336 = vpop.f32.mrf.mxu0
    %v337 = vadd.f32 %v278, %v336
    %v338 = vpop.f32.mrf.mxu0
    %339 = vdwg.mxu0
    %v340 = vmul.f32 %v337, 0.1
    %v341 = vmax.f32 %v337, %v340
    %342 = vst [vmem:[#allocation12] sm:$0xff] %v341
    %v343 = vpack.c.bf16 %v341, %v341
    %v344 = vld [vmem:[#allocation8] sm:$0xf]
    %v345 = vld [vmem:[#allocation8 + $0x4] sm:$0xf]
    %v346 = vld [vmem:[#allocation8 + $0x8] sm:$0xf]
    %v347 = vld [vmem:[#allocation8 + $0xc] sm:$0xf]
    %v348 = vld [vmem:[#allocation8 + $0x10] sm:$0xf]
    %v349 = vld [vmem:[#allocation8 + $0x14] sm:$0xf]
    %v350 = vld [vmem:[#allocation8 + $0x18] sm:$0xf]
    %v351 = vld [vmem:[#allocation8 + $0x1c] sm:$0xf]
    %v352 = vld [vmem:[#allocation8 + $0x20] sm:$0xf]
    %v353 = vld [vmem:[#allocation8 + $0x24] sm:$0xf]
    %v354 = vld [vmem:[#allocation8 + $0x28] sm:$0xf]
    %v355 = vld [vmem:[#allocation8 + $0x2c] sm:$0xf]
    %v356 = vld [vmem:[#allocation8 + $0x30] sm:$0xf]
    %v357 = vld [vmem:[#allocation8 + $0x34] sm:$0xf]
    %v358 = vld [vmem:[#allocation8 + $0x38] sm:$0xf]
    %v359 = vld [vmem:[#allocation8 + $0x3c] sm:$0xf]
    %v360 = vperm.slane %v98, 3
    %v377 = vunpack.c.l.b16 %v344
    %v378 = vunpack.c.l.b16 %v345
    %v379 = vunpack.c.l.b16 %v346
    %v380 = vunpack.c.l.b16 %v347
    %v381 = vunpack.c.l.b16 %v348
    %v382 = vunpack.c.l.b16 %v349
    %v383 = vunpack.c.l.b16 %v350
    %v384 = vunpack.c.l.b16 %v351
    %v385 = vunpack.c.l.b16 %v352
    %v386 = vunpack.c.l.b16 %v353
    %v387 = vunpack.c.l.b16 %v354
    %v388 = vunpack.c.l.b16 %v355
    %v389 = vunpack.c.l.b16 %v356
    %v390 = vunpack.c.l.b16 %v357
    %v391 = vunpack.c.l.b16 %v358
    %v392 = vunpack.c.l.b16 %v359
    %v393 = vpack.c.b16 %v378, %v377
    %v394 = vpack.c.b16 %v380, %v379
    %v395 = vpack.c.b16 %v382, %v381
    %v396 = vpack.c.b16 %v384, %v383
    %v397 = vpack.c.b16 %v386, %v385
    %v398 = vpack.c.b16 %v388, %v387
    %v399 = vpack.c.b16 %v390, %v389
    %v400 = vpack.c.b16 %v392, %v391
    %409 = vmatpush.bf16.msra.mxu0 %v400
    %410 = vmatpush.bf16.msra.mxu0 %v399
    %411 = vmatpush.bf16.msra.mxu0 %v398
    %412 = vmatpush.bf16.msra.mxu0 %v397
    %413 = vmatpush.bf16.msra.mxu0 %v396
    %414 = vmatpush.bf16.msra.mxu0 %v395
    %415 = vmatpush.bf16.msra.mxu0 %v394
    %416 = vmatpush.bf16.msra.mxu0 %v393
    %417 = vmatmul.bf16.gmra.mxu0 %v343
    %v418 = vpop.f32.mrf.mxu0
    %v419 = vadd.f32 %v360, %v418
    %v420 = vpop.f32.mrf.mxu0
    %421 = vdwg.mxu0
    %422 = vmax.xlane.f32.xlu0 %v419
    %v423 = vpop.xlane.xlu0 %422
    %v424 = vsub.f32 %v419, %v423
    %v425 = vmul.f32 %v424, 1.442695
    %v426 = vpow.pop %v425
    %427 = vadd.xlane.f32.xlu0 %v426
    %v428 = vpop.xlane.xlu0 %427
    %v429 = vrcp.pop %v428
    %v430 = vmul.f32 %v426, %v429
    %431 = vst [vmem:[#allocation11] sm:$0xff] %v430
    // Predicated region
    $region42: #{tpu_custom_call.1} parent=1 // pred_check
      _
    $region43: #{tpu_custom_call.1} parent=1 // pred_check_branch
      %433 = sbr.rel (0) target = $region45
    $region44: #{tpu_custom_call.1} parent=1 // pred_region
      %435 = vsyncadd [#allocation4], 0
      %s437 = sshll.u32 [#allocation11], 4
      %s438 = int_to_ptr.vmem [resolvable:$true] %s437
      %s439 = sshll.u32 %s5, 4
      %s440 = int_to_ptr.hbm [resolvable:$true] %s439
      %442 = dma.vmem_to_hbm [thread:$0]  %s438, 128, %s440, [#allocation4]
    $region45: #{tpu_custom_call.1} parent=1 // pred_fallthru
      _
    // Predicated region
    $region46: #{tpu_custom_call.1} parent=1 // pred_check
      _
    $region47: #{tpu_custom_call.1} parent=1 // pred_check_branch
      %444 = sbr.rel (0) target = $region49
    $region48: #{tpu_custom_call.1} parent=1 // pred_region
      %446 = vsyncadd [#allocation13], 0
      %s448 = sshll.u32 [#allocation12], 4
      %s449 = int_to_ptr.vmem [resolvable:$true] %s448
      %s450 = sshll.u32 %s6, 4
      %s451 = int_to_ptr.hbm [resolvable:$true] %s450
      %453 = dma.vmem_to_hbm [thread:$0]  %s449, 128, %s451, [#allocation13]
    $region49: #{tpu_custom_call.1} parent=1 // pred_fallthru
      _
    // Predicated region
    $region50: #{tpu_custom_call.1} parent=1 // pred_check
      _
    $region51: #{tpu_custom_call.1} parent=1 // pred_check_branch
      %455 = sbr.rel (0) target = $region53
    $region52: #{tpu_custom_call.1} parent=1 // pred_region
      %457 = dma.done [#allocation4], 128
    $region53: #{tpu_custom_call.1} parent=1 // pred_fallthru
      _
    // Predicated region
    $region54: #{tpu_custom_call.1} parent=1 // pred_check
      _
    $region55: #{tpu_custom_call.1} parent=1 // pred_check_branch
      %459 = sbr.rel (0) target = $region57
    $region56: #{tpu_custom_call.1} parent=1 // pred_region
      %461 = dma.done [#allocation13], 128
    $region57: #{tpu_custom_call.1} parent=1 // pred_fallthru
      _
    %462 = vsyncpa [#allocation3], 1
    %463 = vsyncpa [#allocation6], 1
    %464 = vsyncpa [#allocation9], 1
    %465 = vsyncpa [#allocation4], 1
    %466 = vsyncpa [#allocation13], 1

// kernel: tpu_custom_call.1
$region0: #{tpu_custom_call.1}
  #allocation0 [shape = 'u32[]', space=smem, size = 0x4, offset = 0x4, fixed_abs, tag = 'smem constant byte address 0x4 - core index']
  #allocation1 [shape = 'u32[72,128]{1,0:T(1,128)}', space=vmem, size = 0x9000, scoped, tag = 'internal scratch']
  %s0 = inlined_call_operand.hbm [shape: bf16[8,128], index: 0, kind: input, shape index: {}]
  %s1 = inlined_call_operand.hbm [shape: bf16[128,128], index: 1, kind: input, shape index: {}]
  %s2 = inlined_call_operand.hbm [shape: bf16[2,128,128], index: 2, kind: input, shape index: {}]
  %s3 = inlined_call_operand.hbm [shape: bf16[128,128], index: 3, kind: input, shape index: {}]
  %s4 = inlined_call_operand.hbm [shape: f32[4,128], index: 4, kind: input, shape index: {}]
  %s5 = inlined_call_operand.hbm [shape: f32[8,128], index: 5, kind: output, shape index: {0}]
  %s6 = inlined_call_operand.hbm [shape: f32[8,128], index: 6, kind: output, shape index: {1}]
  %7 = xla_tuple %s5, %s6
  %s8 = sld [smem:[#allocation0]]
  $region58: #{tpu_custom_call.1} parent=0
    _
  %s10 = ssub.s32 1, %s8
  %s11 = scalar_select 0, %s10, %s8
  $region1: #{tpu_custom_call.1} parent=0
    #allocation2 [shape = 'u8[2048]{0}', space=vmem, size = 0x800, scoped, tag = 'input window, operand 0, single buffered']
    #allocation3 [shape = 's32[1]{0}', space=sflag, size = 0x4, scoped, tag = 'scoped memory for tpu_custom_call.1']
    #allocation4 [shape = 's32[1]{0}', space=sflag, size = 0x4, scoped, tag = 'scoped memory for tpu_custom_call.1']
    #allocation5 [shape = 'u8[32768]{0}', space=vmem, size = 0x8000, scoped, tag = 'input window, operand 1, single buffered']
    #allocation6 [shape = 's32[1]{0}', space=sflag, size = 0x4, scoped, tag = 'scoped memory for tpu_custom_call.1']
    #allocation7 [shape = 'u8[65536]{0}', space=vmem, size = 0x10000, scoped, tag = 'input window, operand 2, single buffered']
    #allocation8 [shape = 'u8[32768]{0}', space=vmem, size = 0x8000, scoped, tag = 'input window, operand 3, single buffered']
    #allocation9 [shape = 's32[1]{0}', space=sflag, size = 0x4, scoped, tag = 'scoped memory for tpu_custom_call.1']
    #allocation10 [shape = 'u8[2048]{0}', space=vmem, size = 0x800, scoped, tag = 'input window, operand 4, single buffered']
    #allocation11 [shape = 'u8[4096]{0}', space=vmem, size = 0x1000, scoped, tag = 'output window, operand 0, single buffered']
    #allocation12 [shape = 'u8[4096]{0}', space=vmem, size = 0x1000, scoped, tag = 'output window, operand 1, single buffered']
    #allocation13 [shape = 's32[1]{0}', space=sflag, size = 0x4, scoped, tag = 'scoped memory for tpu_custom_call.1']
    %12 = vsyncpa [#allocation3], 0
    %13 = vsyncpa [#allocation6], 0
    %14 = vsyncpa [#allocation9], 0
    %15 = vsyncpa [#allocation4], 0
    %16 = vsyncpa [#allocation13], 0
    // Predicated region
    $region2: #{tpu_custom_call.1} parent=1 // pred_check
      _
    $region3: #{tpu_custom_call.1} parent=1 // pred_check_branch
      %18 = sbr.rel (0) target = $region5
    $region4: #{tpu_custom_call.1} parent=1 // pred_region
      %20 = vsyncadd [#allocation3], 0
      %s22 = sshll.u32 %s0, 4
      %s23 = int_to_ptr.hbm [resolvable:$true] %s22
      %s24 = sshll.u32 [#allocation2], 4
      %s25 = int_to_ptr.vmem [resolvable:$true] %s24
      %27 = dma.hbm_to_vmem [thread:$0]  %s23, 64, %s25, [#allocation3]
    $region5: #{tpu_custom_call.1} parent=1 // pred_fallthru
      _
    // Predicated region
    $region6: #{tpu_custom_call.1} parent=1 // pred_check
      _
    $region7: #{tpu_custom_call.1} parent=1 // pred_check_branch
      %29 = sbr.rel (0) target = $region9
    $region8: #{tpu_custom_call.1} parent=1 // pred_region
      %31 = vsyncadd [#allocation6], 0
      %s32 = sshll.u32 %s1, 4
      %s33 = int_to_ptr.hbm [resolvable:$true] %s32
      %s34 = sshll.u32 [#allocation5], 4
      %s35 = int_to_ptr.vmem [resolvable:$true] %s34
      %40 = dma.hbm_to_vmem [thread:$0]  %s33, 1024, %s35, [#allocation6], 64, 64, 4
    $region9: #{tpu_custom_call.1} parent=1 // pred_fallthru
      _
    // Predicated region
    $region10: #{tpu_custom_call.1} parent=1 // pred_check
      _
    $region11: #{tpu_custom_call.1} parent=1 // pred_check_branch
      %42 = sbr.rel (0) target = $region13
    $region12: #{tpu_custom_call.1} parent=1 // pred_region
      %44 = vsyncadd [#allocation6], 0
      %s45 = sshll.u32 %s2, 4
      %s46 = int_to_ptr.hbm [resolvable:$true] %s45
      %s47 = sshll.u32 [#allocation7], 4
      %s48 = int_to_ptr.vmem [resolvable:$true] %s47
      %53 = dma.hbm_to_vmem [thread:$0]  %s46, 2048, %s48, [#allocation6], 64, 64, 4
    $region13: #{tpu_custom_call.1} parent=1 // pred_fallthru
      _
    // Predicated region
    $region14: #{tpu_custom_call.1} parent=1 // pred_check
      _
    $region15: #{tpu_custom_call.1} parent=1 // pred_check_branch
      %55 = sbr.rel (0) target = $region17
    $region16: #{tpu_custom_call.1} parent=1 // pred_region
      %57 = vsyncadd [#allocation9], 0
      %s58 = sshll.u32 %s3, 4
      %s59 = int_to_ptr.hbm [resolvable:$true] %s58
      %s60 = sshll.u32 [#allocation8], 4
      %s61 = int_to_ptr.vmem [resolvable:$true] %s60
      %66 = dma.hbm_to_vmem [thread:$0]  %s59, 1024, %s61, [#allocation9], 64, 64, 4
    $region17: #{tpu_custom_call.1} parent=1 // pred_fallthru
      _
    // Predicated region
    $region18: #{tpu_custom_call.1} parent=1 // pred_check
      _
    $region19: #{tpu_custom_call.1} parent=1 // pred_check_branch
      %68 = sbr.rel (0) target = $region21
    $region20: #{tpu_custom_call.1} parent=1 // pred_region
      %70 = vsyncadd [#allocation9], 0
      %s72 = sshll.u32 %s4, 4
      %s73 = int_to_ptr.hbm [resolvable:$true] %s72
      %s74 = sshll.u32 [#allocation10], 4
      %s75 = int_to_ptr.vmem [resolvable:$true] %s74
      %77 = dma.hbm_to_vmem [thread:$0]  %s73, 64, %s75, [#allocation9]
    $region21: #{tpu_custom_call.1} parent=1 // pred_fallthru
      _
    // Predicated region
    $region22: #{tpu_custom_call.1} parent=1 // pred_check
      _
    $region23: #{tpu_custom_call.1} parent=1 // pred_check_branch
      %79 = sbr.rel (0) target = $region25
    $region24: #{tpu_custom_call.1} parent=1 // pred_region
      %81 = dma.done [#allocation3], 64
    $region25: #{tpu_custom_call.1} parent=1 // pred_fallthru
      _
    // Predicated region
    $region26: #{tpu_custom_call.1} parent=1 // pred_check
      _
    $region27: #{tpu_custom_call.1} parent=1 // pred_check_branch
      %83 = sbr.rel (0) target = $region29
    $region28: #{tpu_custom_call.1} parent=1 // pred_region
      %85 = dma.done [#allocation6], 1024
    $region29: #{tpu_custom_call.1} parent=1 // pred_fallthru
      _
    // Predicated region
    $region30: #{tpu_custom_call.1} parent=1 // pred_check
      _
    $region31: #{tpu_custom_call.1} parent=1 // pred_check_branch
      %87 = sbr.rel (0) target = $region33
    $region32: #{tpu_custom_call.1} parent=1 // pred_region
      %89 = dma.done [#allocation6], 2048
    $region33: #{tpu_custom_call.1} parent=1 // pred_fallthru
      _
    // Predicated region
    $region34: #{tpu_custom_call.1} parent=1 // pred_check
      _
    $region35: #{tpu_custom_call.1} parent=1 // pred_check_branch
      %91 = sbr.rel (0) target = $region37
    $region36: #{tpu_custom_call.1} parent=1 // pred_region
      %93 = dma.done [#allocation9], 1024
    $region37: #{tpu_custom_call.1} parent=1 // pred_fallthru
      _
    // Predicated region
    $region38: #{tpu_custom_call.1} parent=1 // pred_check
      _
    $region39: #{tpu_custom_call.1} parent=1 // pred_check_branch
      %95 = sbr.rel (0) target = $region41
    $region40: #{tpu_custom_call.1} parent=1 // pred_region
      %97 = dma.done [#allocation9], 64
    $region41: #{tpu_custom_call.1} parent=1 // pred_fallthru
      _
    %v98 = vld [vmem:[#allocation10] sm:$0xf]
    %v99 = vld [vmem:[#allocation2] sm:$0xf]
    %v100 = vld [vmem:[#allocation5] sm:$0xf]
    %v101 = vld [vmem:[#allocation5 + $0x4] sm:$0xf]
    %v102 = vld [vmem:[#allocation5 + $0x8] sm:$0xf]
    %v103 = vld [vmem:[#allocation5 + $0xc] sm:$0xf]
    %v104 = vld [vmem:[#allocation5 + $0x10] sm:$0xf]
    %v105 = vld [vmem:[#allocation5 + $0x14] sm:$0xf]
    %v106 = vld [vmem:[#allocation5 + $0x18] sm:$0xf]
    %v107 = vld [vmem:[#allocation5 + $0x1c] sm:$0xf]
    %v108 = vld [vmem:[#allocation5 + $0x20] sm:$0xf]
    %v109 = vld [vmem:[#allocation5 + $0x24] sm:$0xf]
    %v110 = vld [vmem:[#allocation5 + $0x28] sm:$0xf]
    %v111 = vld [vmem:[#allocation5 + $0x2c] sm:$0xf]
    %v112 = vld [vmem:[#allocation5 + $0x30] sm:$0xf]
    %v113 = vld [vmem:[#allocation5 + $0x34] sm:$0xf]
    %v114 = vld [vmem:[#allocation5 + $0x38] sm:$0xf]
    %v115 = vld [vmem:[#allocation5 + $0x3c] sm:$0xf]
    %v116 = vperm.slane %v98, 0
    %v133 = vunpack.c.l.b16 %v100
    %v134 = vunpack.c.l.b16 %v101
    %v135 = vunpack.c.l.b16 %v102
    %v136 = vunpack.c.l.b16 %v103
    %v137 = vunpack.c.l.b16 %v104
    %v138 = vunpack.c.l.b16 %v105
    %v139 = vunpack.c.l.b16 %v106
    %v140 = vunpack.c.l.b16 %v107
    %v141 = vunpack.c.l.b16 %v108
    %v142 = vunpack.c.l.b16 %v109
    %v143 = vunpack.c.l.b16 %v110
    %v144 = vunpack.c.l.b16 %v111
    %v145 = vunpack.c.l.b16 %v112
    %v146 = vunpack.c.l.b16 %v113
    %v147 = vunpack.c.l.b16 %v114
    %v148 = vunpack.c.l.b16 %v115
    %v149 = vpack.c.b16 %v134, %v133
    %v150 = vpack.c.b16 %v136, %v135
    %v151 = vpack.c.b16 %v138, %v137
    %v152 = vpack.c.b16 %v140, %v139
    %v153 = vpack.c.b16 %v142, %v141
    %v154 = vpack.c.b16 %v144, %v143
    %v155 = vpack.c.b16 %v146, %v145
    %v156 = vpack.c.b16 %v148, %v147
    %165 = vmatpush.bf16.msra.mxu0 %v156
    %166 = vmatpush.bf16.msra.mxu0 %v155
    %167 = vmatpush.bf16.msra.mxu0 %v154
    %168 = vmatpush.bf16.msra.mxu0 %v153
    %169 = vmatpush.bf16.msra.mxu0 %v152
    %170 = vmatpush.bf16.msra.mxu0 %v151
    %171 = vmatpush.bf16.msra.mxu0 %v150
    %172 = vmatpush.bf16.msra.mxu0 %v149
    %173 = vmatmul.bf16.gmra.mxu0 %v99
    %v174 = vpop.f32.mrf.mxu0
    %v175 = vadd.f32 %v116, %v174
    %v176 = vpop.f32.mrf.mxu0
    %177 = vdwg.mxu0
    %v178 = vmax.f32 %v175, 0.0
    %v179 = vpack.c.bf16 %v178, %v178
    %v180 = vld [vmem:[#allocation7] sm:$0xf]
    %v181 = vld [vmem:[#allocation7 + $0x4] sm:$0xf]
    %v182 = vld [vmem:[#allocation7 + $0x8] sm:$0xf]
    %v183 = vld [vmem:[#allocation7 + $0xc] sm:$0xf]
    %v184 = vld [vmem:[#allocation7 + $0x10] sm:$0xf]
    %v185 = vld [vmem:[#allocation7 + $0x14] sm:$0xf]
    %v186 = vld [vmem:[#allocation7 + $0x18] sm:$0xf]
    %v187 = vld [vmem:[#allocation7 + $0x1c] sm:$0xf]
    %v188 = vld [vmem:[#allocation7 + $0x20] sm:$0xf]
    %v189 = vld [vmem:[#allocation7 + $0x24] sm:$0xf]
    %v190 = vld [vmem:[#allocation7 + $0x28] sm:$0xf]
    %v191 = vld [vmem:[#allocation7 + $0x2c] sm:$0xf]
    %v192 = vld [vmem:[#allocation7 + $0x30] sm:$0xf]
    %v193 = vld [vmem:[#allocation7 + $0x34] sm:$0xf]
    %v194 = vld [vmem:[#allocation7 + $0x38] sm:$0xf]
    %v195 = vld [vmem:[#allocation7 + $0x3c] sm:$0xf]
    %v196 = vperm.slane %v98, 1
    %v213 = vunpack.c.l.b16 %v180
    %v214 = vunpack.c.l.b16 %v181
    %v215 = vunpack.c.l.b16 %v182
    %v216 = vunpack.c.l.b16 %v183
    %v217 = vunpack.c.l.b16 %v184
    %v218 = vunpack.c.l.b16 %v185
    %v219 = vunpack.c.l.b16 %v186
    %v220 = vunpack.c.l.b16 %v187
    %v221 = vunpack.c.l.b16 %v188
    %v222 = vunpack.c.l.b16 %v189
    %v223 = vunpack.c.l.b16 %v190
    %v224 = vunpack.c.l.b16 %v191
    %v225 = vunpack.c.l.b16 %v192
    %v226 = vunpack.c.l.b16 %v193
    %v227 = vunpack.c.l.b16 %v194
    %v228 = vunpack.c.l.b16 %v195
    %v229 = vpack.c.b16 %v214, %v213
    %v230 = vpack.c.b16 %v216, %v215
    %v231 = vpack.c.b16 %v218, %v217
    %v232 = vpack.c.b16 %v220, %v219
    %v233 = vpack.c.b16 %v222, %v221
    %v234 = vpack.c.b16 %v224, %v223
    %v235 = vpack.c.b16 %v226, %v225
    %v236 = vpack.c.b16 %v228, %v227
    %245 = vmatpush.bf16.msra.mxu0 %v236
    %246 = vmatpush.bf16.msra.mxu0 %v235
    %247 = vmatpush.bf16.msra.mxu0 %v234
    %248 = vmatpush.bf16.msra.mxu0 %v233
    %249 = vmatpush.bf16.msra.mxu0 %v232
    %250 = vmatpush.bf16.msra.mxu0 %v231
    %251 = vmatpush.bf16.msra.mxu0 %v230
    %252 = vmatpush.bf16.msra.mxu0 %v229
    %253 = vmatmul.bf16.gmra.mxu0 %v179
    %v254 = vpop.f32.mrf.mxu0
    %v255 = vadd.f32 %v196, %v254
    %v256 = vpop.f32.mrf.mxu0
    %257 = vdwg.mxu0
    %v258 = vmul.f32 %v255, 0.1
    %v259 = vmax.f32 %v255, %v258
    %v260 = vpack.c.bf16 %v259, %v259
    %s261 = scalar_lea.vmem [#allocation7], 64
    %v262 = vld [vmem:[%s261] sm:$0xf]
    %v263 = vld [vmem:[%s261 + $0x4] sm:$0xf]
    %v264 = vld [vmem:[%s261 + $0x8] sm:$0xf]
    %v265 = vld [vmem:[%s261 + $0xc] sm:$0xf]
    %v266 = vld [vmem:[%s261 + $0x10] sm:$0xf]
    %v267 = vld [vmem:[%s261 + $0x14] sm:$0xf]
    %v268 = vld [vmem:[%s261 + $0x18] sm:$0xf]
    %v269 = vld [vmem:[%s261 + $0x1c] sm:$0xf]
    %v270 = vld [vmem:[%s261 + $0x20] sm:$0xf]
    %v271 = vld [vmem:[%s261 + $0x24] sm:$0xf]
    %v272 = vld [vmem:[%s261 + $0x28] sm:$0xf]
    %v273 = vld [vmem:[%s261 + $0x2c] sm:$0xf]
    %v274 = vld [vmem:[%s261 + $0x30] sm:$0xf]
    %v275 = vld [vmem:[%s261 + $0x34] sm:$0xf]
    %v276 = vld [vmem:[%s261 + $0x38] sm:$0xf]
    %v277 = vld [vmem:[%s261 + $0x3c] sm:$0xf]
    %v278 = vperm.slane %v98, 2
    %v295 = vunpack.c.l.b16 %v262
    %v296 = vunpack.c.l.b16 %v263
    %v297 = vunpack.c.l.b16 %v264
    %v298 = vunpack.c.l.b16 %v265
    %v299 = vunpack.c.l.b16 %v266
    %v300 = vunpack.c.l.b16 %v267
    %v301 = vunpack.c.l.b16 %v268
    %v302 = vunpack.c.l.b16 %v269
    %v303 = vunpack.c.l.b16 %v270
    %v304 = vunpack.c.l.b16 %v271
    %v305 = vunpack.c.l.b16 %v272
    %v306 = vunpack.c.l.b16 %v273
    %v307 = vunpack.c.l.b16 %v274
    %v308 = vunpack.c.l.b16 %v275
    %v309 = vunpack.c.l.b16 %v276
    %v310 = vunpack.c.l.b16 %v277
    %v311 = vpack.c.b16 %v296, %v295
    %v312 = vpack.c.b16 %v298, %v297
    %v313 = vpack.c.b16 %v300, %v299
    %v314 = vpack.c.b16 %v302, %v301
    %v315 = vpack.c.b16 %v304, %v303
    %v316 = vpack.c.b16 %v306, %v305
    %v317 = vpack.c.b16 %v308, %v307
    %v318 = vpack.c.b16 %v310, %v309
    %327 = vmatpush.bf16.msra.mxu0 %v318
    %328 = vmatpush.bf16.msra.mxu0 %v317
    %329 = vmatpush.bf16.msra.mxu0 %v316
    %330 = vmatpush.bf16.msra.mxu0 %v315
    %331 = vmatpush.bf16.msra.mxu0 %v314
    %332 = vmatpush.bf16.msra.mxu0 %v313
    %333 = vmatpush.bf16.msra.mxu0 %v312
    %334 = vmatpush.bf16.msra.mxu0 %v311
    %335 = vmatmul.bf16.gmra.mxu0 %v260
    %v336 = vpop.f32.mrf.mxu0
    %v337 = vadd.f32 %v278, %v336
    %v338 = vpop.f32.mrf.mxu0
    %339 = vdwg.mxu0
    %v340 = vmul.f32 %v337, 0.1
    %v341 = vmax.f32 %v337, %v340
    %342 = vst [vmem:[#allocation12] sm:$0xff] %v341
    %v343 = vpack.c.bf16 %v341, %v341
    %v344 = vld [vmem:[#allocation8] sm:$0xf]
    %v345 = vld [vmem:[#allocation8 + $0x4] sm:$0xf]
    %v346 = vld [vmem:[#allocation8 + $0x8] sm:$0xf]
    %v347 = vld [vmem:[#allocation8 + $0xc] sm:$0xf]
    %v348 = vld [vmem:[#allocation8 + $0x10] sm:$0xf]
    %v349 = vld [vmem:[#allocation8 + $0x14] sm:$0xf]
    %v350 = vld [vmem:[#allocation8 + $0x18] sm:$0xf]
    %v351 = vld [vmem:[#allocation8 + $0x1c] sm:$0xf]
    %v352 = vld [vmem:[#allocation8 + $0x20] sm:$0xf]
    %v353 = vld [vmem:[#allocation8 + $0x24] sm:$0xf]
    %v354 = vld [vmem:[#allocation8 + $0x28] sm:$0xf]
    %v355 = vld [vmem:[#allocation8 + $0x2c] sm:$0xf]
    %v356 = vld [vmem:[#allocation8 + $0x30] sm:$0xf]
    %v357 = vld [vmem:[#allocation8 + $0x34] sm:$0xf]
    %v358 = vld [vmem:[#allocation8 + $0x38] sm:$0xf]
    %v359 = vld [vmem:[#allocation8 + $0x3c] sm:$0xf]
    %v360 = vperm.slane %v98, 3
    %v377 = vunpack.c.l.b16 %v344
    %v378 = vunpack.c.l.b16 %v345
    %v379 = vunpack.c.l.b16 %v346
    %v380 = vunpack.c.l.b16 %v347
    %v381 = vunpack.c.l.b16 %v348
    %v382 = vunpack.c.l.b16 %v349
    %v383 = vunpack.c.l.b16 %v350
    %v384 = vunpack.c.l.b16 %v351
    %v385 = vunpack.c.l.b16 %v352
    %v386 = vunpack.c.l.b16 %v353
    %v387 = vunpack.c.l.b16 %v354
    %v388 = vunpack.c.l.b16 %v355
    %v389 = vunpack.c.l.b16 %v356
    %v390 = vunpack.c.l.b16 %v357
    %v391 = vunpack.c.l.b16 %v358
    %v392 = vunpack.c.l.b16 %v359
    %v393 = vpack.c.b16 %v378, %v377
    %v394 = vpack.c.b16 %v380, %v379
    %v395 = vpack.c.b16 %v382, %v381
    %v396 = vpack.c.b16 %v384, %v383
    %v397 = vpack.c.b16 %v386, %v385
    %v398 = vpack.c.b16 %v388, %v387
    %v399 = vpack.c.b16 %v390, %v389
    %v400 = vpack.c.b16 %v392, %v391
    %409 = vmatpush.bf16.msra.mxu0 %v400
    %410 = vmatpush.bf16.msra.mxu0 %v399
    %411 = vmatpush.bf16.msra.mxu0 %v398
    %412 = vmatpush.bf16.msra.mxu0 %v397
    %413 = vmatpush.bf16.msra.mxu0 %v396
    %414 = vmatpush.bf16.msra.mxu0 %v395
    %415 = vmatpush.bf16.msra.mxu0 %v394
    %416 = vmatpush.bf16.msra.mxu0 %v393
    %417 = vmatmul.bf16.gmra.mxu0 %v343
    %v418 = vpop.f32.mrf.mxu0
    %v419 = vadd.f32 %v360, %v418
    %v420 = vpop.f32.mrf.mxu0
    %421 = vdwg.mxu0
    %422 = vmax.xlane.f32.xlu0 %v419
    %v423 = vpop.xlane.xlu0 %422
    %v424 = vsub.f32 %v419, %v423
    %v425 = vmul.f32 %v424, 1.442695
    %v426 = vpow.pop %v425
    %427 = vadd.xlane.f32.xlu0 %v426
    %v428 = vpop.xlane.xlu0 %427
    %v429 = vrcp.pop %v428
    %v430 = vmul.f32 %v426, %v429
    %431 = vst [vmem:[#allocation11] sm:$0xff] %v430
    // Predicated region
    $region42: #{tpu_custom_call.1} parent=1 // pred_check
      _
    $region43: #{tpu_custom_call.1} parent=1 // pred_check_branch
      %433 = sbr.rel (0) target = $region45
    $region44: #{tpu_custom_call.1} parent=1 // pred_region
      %435 = vsyncadd [#allocation4], 0
      %s437 = sshll.u32 [#allocation11], 4
      %s438 = int_to_ptr.vmem [resolvable:$true] %s437
      %s439 = sshll.u32 %s5, 4
      %s440 = int_to_ptr.hbm [resolvable:$true] %s439
      %442 = dma.vmem_to_hbm [thread:$0]  %s438, 128, %s440, [#allocation4]
    $region45: #{tpu_custom_call.1} parent=1 // pred_fallthru
      _
    // Predicated region
    $region46: #{tpu_custom_call.1} parent=1 // pred_check
      _
    $region47: #{tpu_custom_call.1} parent=1 // pred_check_branch
      %444 = sbr.rel (0) target = $region49
    $region48: #{tpu_custom_call.1} parent=1 // pred_region
      %446 = vsyncadd [#allocation13], 0
      %s448 = sshll.u32 [#allocation12], 4
      %s449 = int_to_ptr.vmem [resolvable:$true] %s448
      %s450 = sshll.u32 %s6, 4
      %s451 = int_to_ptr.hbm [resolvable:$true] %s450
      %453 = dma.vmem_to_hbm [thread:$0]  %s449, 128, %s451, [#allocation13]
    $region49: #{tpu_custom_call.1} parent=1 // pred_fallthru
      _
    // Predicated region
    $region50: #{tpu_custom_call.1} parent=1 // pred_check
      _
    $region51: #{tpu_custom_call.1} parent=1 // pred_check_branch
      %455 = sbr.rel (0) target = $region53
    $region52: #{tpu_custom_call.1} parent=1 // pred_region
      %457 = dma.done [#allocation4], 128
    $region53: #{tpu_custom_call.1} parent=1 // pred_fallthru
      _
    // Predicated region
    $region54: #{tpu_custom_call.1} parent=1 // pred_check
      _
    $region55: #{tpu_custom_call.1} parent=1 // pred_check_branch
      %459 = sbr.rel (0) target = $region57
    $region56: #{tpu_custom_call.1} parent=1 // pred_region
      %461 = dma.done [#allocation13], 128
    $region57: #{tpu_custom_call.1} parent=1 // pred_fallthru
      _
    %462 = vsyncpa [#allocation3], 1
    %463 = vsyncpa [#allocation6], 1
    %464 = vsyncpa [#allocation9], 1
    %465 = vsyncpa [#allocation4], 1
    %466 = vsyncpa [#allocation13], 1

</llo_original>
